<compile_context>
chip_gen: v7x
topology: tpu7x:2x2x1
jax: 0.10.0
libtpu: 0.0.40
codegen_flags: <defaults>
</compile_context>

<pallas_src>
import jax
import jax.numpy as jnp
import numpy as np
from jax.experimental import pallas as pl
from jax.experimental.pallas import tpu as pltpu


def _round_up(x, m):
    return (x + m - 1) // m * m


# ---------------------------------------------------------------------------
# Fused kernel factory: per-view MLP + softplus + packed 'average' aggregation
# ---------------------------------------------------------------------------
def _make_fused_kernel(num_views):
    """Ref layout (closure over static num_views):
         refs[0:V]      x_v blocks                      (tile_b, din_v)
         refs[V:5V]     per-view (w1, b1, w2p, b2p)     whole arrays, VMEM-resident
         refs[5V]       averaging projection            (out_pad, out_pad)
         refs[5V+1]     packed output block             (tile_b, out_pad)
    """
    def kernel(*refs):
        x_refs = refs[:num_views]
        w_refs = refs[num_views:5 * num_views]
        avg_ref = refs[5 * num_views]
        out_ref = refs[5 * num_views + 1]

        acc = None
        # num_views is small and static -> Python unroll at trace time.
        # TODO(synk): for V >= 8 switch to lax.fori_loop over stacked weights to
        #             bound live ranges / VMEM temporaries.
        for v in range(num_views):
            w1, b1, w2p, b2p = w_refs[4 * v: 4 * v + 4]
            h = jnp.dot(x_refs[v][...], w1[...], preferred_element_type=jnp.float32)
            h = jnp.maximum(h + b1[...], 0.0)          # ReLU (Dropout == identity, eval)
            # w2p/b2p place view v's real C columns at lanes [v*C, (v+1)*C); every other
            # lane has bias -1e9 so softplus() is exactly 0 there.
            e = jnp.dot(h, w2p[...], preferred_element_type=jnp.float32) + b2p[...]
            ev = jnp.logaddexp(e, 0.0)                  # softplus(x) = log(1 + exp(x))
            acc = ev if acc is None else acc + ev       # segments are disjoint -> pure pack
        # 'average' aggregation: constant projection gathers the V per-view segments
        # into the average segment (scaled 1/V) — one tiny extra matmul on the idle MXU.
        out_ref[...] = acc + jnp.dot(acc, avg_ref[...], preferred_element_type=jnp.float32)

    return kernel


# ---------------------------------------------------------------------------
# DBFModel forward (aggregation='average')
# ---------------------------------------------------------------------------
def dbf_model_forward(params, X):
    """params: list (one per view) of dicts with
         w1 [din_v, H_v], b1 [H_v] or [1, H_v], w2 [H_v, C], b2 [C] or [1, C]
       (weights stored transposed w.r.t. torch.nn.Linear.weight).
       X: list of per-view inputs, each [B, din_v] (same B across views).
       Returns (evidences dict {v: [B, C]}, evidence_a [B, C])."""
    V = len(X)
    B = X[0].shape[0]
    C = params[0]["w2"].shape[1]
    out_pad = _round_up((V + 1) * C, 128)   # packed: [view_0 | ... | view_{V-1} | avg | 0pad]

    # Balanced batch tiles: <=512 rows, 8-aligned, >=2 tiles (keep both v7x cores busy).
    n_tiles = max(pl.cdiv(B, 512), 2)
    tile_b = _round_up(pl.cdiv(B, n_tiles), 8)
    b_pad = _round_up(B, tile_b)
    grid_b = b_pad // tile_b

    neg = jnp.float32(-1e9)   # softplus(-1e9) == 0.0 exactly in f32

    xs, x_specs, w_args = [], [], []
    for v in range(V):
        xv = X[v].astype(jnp.float32)
        din_v = xv.shape[1]
        # Pad batch rows only; NO feature padding (padded rows are sliced away later).
        xs.append(jnp.pad(xv, ((0, b_pad - B), (0, 0))))
        x_specs.append(pl.BlockSpec((tile_b, din_v), lambda i: (i, 0)))

        p = params[v]
        w1 = p["w1"].astype(jnp.float32)
        b1 = p["b1"].astype(jnp.float32).reshape(1, -1)
        h_v = w1.shape[1]
        w2p = jnp.zeros((h_v, out_pad), jnp.float32)
        w2p = w2p.at[:, v * C:(v + 1) * C].set(p["w2"].astype(jnp.float32))
        b2p = jnp.full((1, out_pad), neg, jnp.float32)
        b2p = b2p.at[:, v * C:(v + 1) * C].set(p["b2"].astype(jnp.float32).reshape(1, -1))
        w_args += [w1, b1, w2p, b2p]

    # Constant averaging projection: lane (v*C + k) -> lane (V*C + k) with weight 1/V.
    avg_np = np.zeros((out_pad, out_pad), np.float32)
    for v in range(V):
        avg_np[v * C:(v + 1) * C, V * C:(V + 1) * C] = np.eye(C, dtype=np.float32) / V
    avg_mat = jnp.asarray(avg_np)

    # Grid-invariant weights/projection: whole-array, VMEM-resident (single-buffered).
    vmem_spec = pl.BlockSpec(memory_space=pltpu.MemorySpace.VMEM)
    in_specs = x_specs + [vmem_spec] * (4 * V + 1)
    args = xs + w_args + [avg_mat]

    # Explicit VMEM budget (generous 4x margin), clamped to the v7x 64 MiB ceiling.
    bytes_x = sum(2 * tile_b * x.shape[1] * 4 for x in xs)                 # double-buffered
    bytes_w = sum(int(np.prod(a.shape)) * 4 for a in w_args) + out_pad * out_pad * 4
    bytes_out = 2 * tile_b * out_pad * 4
    max_h = max(p["w1"].shape[1] for p in params)
    bytes_tmp = V * tile_b * (max_h + 2 * out_pad) * 4
    vmem_limit = int(min(64 * 1024 * 1024,
                         max(32 * 1024 * 1024,
                             4 * (bytes_x + bytes_w + bytes_out + bytes_tmp))))

    out = pl.pallas_call(
        _make_fused_kernel(V),
        out_shape=jax.ShapeDtypeStruct((b_pad, out_pad), jnp.float32),
        grid=(grid_b,),
        in_specs=in_specs,
        out_specs=pl.BlockSpec((tile_b, out_pad), lambda i: (i, 0)),
        compiler_params=pltpu.CompilerParams(
            dimension_semantics=("parallel",),
            vmem_limit_bytes=vmem_limit,
        ),
    )(*args)

    evidences = {v: out[:B, v * C:(v + 1) * C] for v in range(V)}
    evidence_a = out[:B, V * C:(V + 1) * C]
    return evidences, evidence_a


# ---------------------------------------------------------------------------
# Pure-JAX reference (silent correctness check)
# ---------------------------------------------------------------------------
def _ref_forward(params, X):
    evs = []
    for v, xv in enumerate(X):
        p = params[v]
        h = jnp.maximum(xv @ p["w1"] + p["b1"].reshape(1, -1), 0.0)
        e = h @ p["w2"] + p["b2"].reshape(1, -1)
        evs.append(jax.nn.softplus(e))
    return evs, jnp.mean(jnp.stack(evs, axis=0), axis=0)


if __name__ == "__main__":
    # Small, deterministic problem: 2 views, batch=16, num_classes=8,
    # per-view dims = [input_dim, hidden_dim] -> Linear(in,h), ReLU, Dropout, Linear(h,C).
    num_views = 2
    num_classes = 8
    batch = 16
    dims = [[32, 64], [16, 64]]

    key = jax.random.PRNGKey(0)
    keys = jax.random.split(key, 1 + 4 * num_views)

    params = []
    k = 0
    for v in range(num_views):
        din, h = dims[v]
        w1 = 0.1 * jax.random.normal(keys[k], (din, h), jnp.float32); k += 1
        b1 = 0.1 * jax.random.normal(keys[k], (1, h), jnp.float32); k += 1
        w2 = 0.1 * jax.random.normal(keys[k], (h, num_classes), jnp.float32); k += 1
        b2 = 0.1 * jax.random.normal(keys[k], (1, num_classes), jnp.float32); k += 1
        params.append(dict(w1=w1, b1=b1, w2=w2, b2=b2))

    xkeys = jax.random.split(keys[k], num_views)
    X = [jax.random.normal(xkeys[v], (batch, dims[v][0]), jnp.float32)
         for v in range(num_views)]

    evidences, evidence_a = dbf_model_forward(params, X)
    evidence_a = jax.block_until_ready(evidence_a)

    # Silent correctness check against the pure-JAX reference.
    ref_evs, ref_a = _ref_forward(params, X)
    assert np.allclose(np.asarray(evidence_a), np.asarray(ref_a), atol=1e-5, rtol=1e-5)
    for v in range(num_views):
        assert np.allclose(np.asarray(evidences[v]), np.asarray(ref_evs[v]),
                           atol=1e-5, rtol=1e-5)

    print("KERNEL_OK")
</pallas_src>

<mosaic_0001>
module attributes {stable_mosaic.version = 11 : i64} {
  func.func @kernel(%arg0: i32, %arg1: memref<8x32xf32, #tpu.memory_space<vmem>>, %arg2: memref<8x16xf32, #tpu.memory_space<vmem>>, %arg3: memref<32x64xf32, #tpu.memory_space<vmem>>, %arg4: memref<1x64xf32, #tpu.memory_space<vmem>>, %arg5: memref<64x128xf32, #tpu.memory_space<vmem>>, %arg6: memref<1x128xf32, #tpu.memory_space<vmem>>, %arg7: memref<16x64xf32, #tpu.memory_space<vmem>>, %arg8: memref<1x64xf32, #tpu.memory_space<vmem>>, %arg9: memref<64x128xf32, #tpu.memory_space<vmem>>, %arg10: memref<1x128xf32, #tpu.memory_space<vmem>>, %arg11: memref<128x128xf32, #tpu.memory_space<vmem>>, %arg12: memref<8x128xf32, #tpu.memory_space<vmem>>) attributes {dimension_semantics = [#tpu.dimension_semantics<parallel>], iteration_bounds = array<i64: 2>, scalar_prefetch = 0 : i64, scratch_operands = 0 : i64, tpu.core_type = #tpu.core_type<tc>, window_params = [{transform_indices = @transform_0, window_bounds = array<i64: 8, 32>}, {transform_indices = @transform_1, window_bounds = array<i64: 8, 16>}, {pipeline_mode = #tpu.pipeline_mode<synchronous>, transform_indices = @transform_2, window_bounds = array<i64: 32, 64>}, {pipeline_mode = #tpu.pipeline_mode<synchronous>, transform_indices = @transform_3, window_bounds = array<i64: 1, 64>}, {pipeline_mode = #tpu.pipeline_mode<synchronous>, transform_indices = @transform_4, window_bounds = array<i64: 64, 128>}, {pipeline_mode = #tpu.pipeline_mode<synchronous>, transform_indices = @transform_5, window_bounds = array<i64: 1, 128>}, {pipeline_mode = #tpu.pipeline_mode<synchronous>, transform_indices = @transform_6, window_bounds = array<i64: 16, 64>}, {pipeline_mode = #tpu.pipeline_mode<synchronous>, transform_indices = @transform_7, window_bounds = array<i64: 1, 64>}, {pipeline_mode = #tpu.pipeline_mode<synchronous>, transform_indices = @transform_8, window_bounds = array<i64: 64, 128>}, {pipeline_mode = #tpu.pipeline_mode<synchronous>, transform_indices = @transform_9, window_bounds = array<i64: 1, 128>}, {pipeline_mode = #tpu.pipeline_mode<synchronous>, transform_indices = @transform_10, window_bounds = array<i64: 128, 128>}, {transform_indices = @transform_11, window_bounds = array<i64: 8, 128>}]} {
    %c0 = arith.constant 0 : index
    %c0_0 = arith.constant 0 : index
    %0 = vector.load %arg1[%c0, %c0_0] : memref<8x32xf32, #tpu.memory_space<vmem>>, vector<8x32xf32>
    %c0_1 = arith.constant 0 : index
    %c0_2 = arith.constant 0 : index
    %1 = vector.load %arg3[%c0_1, %c0_2] : memref<32x64xf32, #tpu.memory_space<vmem>>, vector<32x64xf32>
    %cst = arith.constant dense<0.000000e+00> : vector<8x64xf32>
    %2 = tpu.matmul %0, %1, %cst {dimension_numbers = #tpu.dot_dimension_numbers<[1], [0], [0], [1], [0, 0, 1, 1], [], []>} : vector<8x32xf32>, vector<32x64xf32>, vector<8x64xf32> -> vector<8x64xf32>
    %c0_3 = arith.constant 0 : index
    %c0_4 = arith.constant 0 : index
    %3 = vector.load %arg4[%c0_3, %c0_4] : memref<1x64xf32, #tpu.memory_space<vmem>>, vector<1x64xf32>
    %4 = vector.broadcast %3 : vector<1x64xf32> to vector<8x64xf32>
    %5 = arith.addf %2, %4 : vector<8x64xf32>
    %cst_5 = arith.constant 0.000000e+00 : f32
    %6 = vector.broadcast %cst_5 : f32 to vector<8x64xf32>
    %7 = arith.maximumf %5, %6 : vector<8x64xf32>
    %c0_6 = arith.constant 0 : index
    %c0_7 = arith.constant 0 : index
    %8 = vector.load %arg5[%c0_6, %c0_7] : memref<64x128xf32, #tpu.memory_space<vmem>>, vector<64x128xf32>
    %cst_8 = arith.constant dense<0.000000e+00> : vector<8x128xf32>
    %9 = tpu.matmul %7, %8, %cst_8 {dimension_numbers = #tpu.dot_dimension_numbers<[1], [0], [0], [1], [0, 0, 1, 1], [], []>} : vector<8x64xf32>, vector<64x128xf32>, vector<8x128xf32> -> vector<8x128xf32>
    %c0_9 = arith.constant 0 : index
    %c0_10 = arith.constant 0 : index
    %10 = vector.load %arg6[%c0_9, %c0_10] : memref<1x128xf32, #tpu.memory_space<vmem>>, vector<1x128xf32>
    %11 = vector.broadcast %10 : vector<1x128xf32> to vector<8x128xf32>
    %12 = arith.addf %9, %11 : vector<8x128xf32>
    %cst_11 = arith.constant 0.000000e+00 : f32
    %13 = vector.broadcast %cst_11 : f32 to vector<8x128xf32>
    %14 = arith.maximumf %12, %13 : vector<8x128xf32>
    %15 = vector.broadcast %cst_11 : f32 to vector<8x128xf32>
    %16 = arith.subf %12, %15 : vector<8x128xf32>
    %17 = arith.cmpf one, %16, %16 : vector<8x128xf32>
    %18 = vector.broadcast %cst_11 : f32 to vector<8x128xf32>
    %19 = arith.addf %12, %18 : vector<8x128xf32>
    %20 = math.absf %16 : vector<8x128xf32>
    %cst_12 = arith.constant 0.000000e+00 : f32
    %21 = vector.broadcast %cst_12 : f32 to vector<8x128xf32>
    %22 = arith.subf %21, %20 : vector<8x128xf32>
    %23 = math.exp %22 : vector<8x128xf32>
    %24 = math.log1p %23 : vector<8x128xf32>
    %25 = arith.addf %14, %24 : vector<8x128xf32>
    %26 = arith.select %17, %19, %25 : vector<8x128xi1>, vector<8x128xf32>
    %c0_13 = arith.constant 0 : index
    %c0_14 = arith.constant 0 : index
    %27 = vector.load %arg2[%c0_13, %c0_14] : memref<8x16xf32, #tpu.memory_space<vmem>>, vector<8x16xf32>
    %c0_15 = arith.constant 0 : index
    %c0_16 = arith.constant 0 : index
    %28 = vector.load %arg7[%c0_15, %c0_16] : memref<16x64xf32, #tpu.memory_space<vmem>>, vector<16x64xf32>
    %cst_17 = arith.constant dense<0.000000e+00> : vector<8x64xf32>
    %29 = tpu.matmul %27, %28, %cst_17 {dimension_numbers = #tpu.dot_dimension_numbers<[1], [0], [0], [1], [0, 0, 1, 1], [], []>} : vector<8x16xf32>, vector<16x64xf32>, vector<8x64xf32> -> vector<8x64xf32>
    %c0_18 = arith.constant 0 : index
    %c0_19 = arith.constant 0 : index
    %30 = vector.load %arg8[%c0_18, %c0_19] : memref<1x64xf32, #tpu.memory_space<vmem>>, vector<1x64xf32>
    %31 = vector.broadcast %30 : vector<1x64xf32> to vector<8x64xf32>
    %32 = arith.addf %29, %31 : vector<8x64xf32>
    %cst_20 = arith.constant 0.000000e+00 : f32
    %33 = vector.broadcast %cst_20 : f32 to vector<8x64xf32>
    %34 = arith.maximumf %32, %33 : vector<8x64xf32>
    %c0_21 = arith.constant 0 : index
    %c0_22 = arith.constant 0 : index
    %35 = vector.load %arg9[%c0_21, %c0_22] : memref<64x128xf32, #tpu.memory_space<vmem>>, vector<64x128xf32>
    %cst_23 = arith.constant dense<0.000000e+00> : vector<8x128xf32>
    %36 = tpu.matmul %34, %35, %cst_23 {dimension_numbers = #tpu.dot_dimension_numbers<[1], [0], [0], [1], [0, 0, 1, 1], [], []>} : vector<8x64xf32>, vector<64x128xf32>, vector<8x128xf32> -> vector<8x128xf32>
    %c0_24 = arith.constant 0 : index
    %c0_25 = arith.constant 0 : index
    %37 = vector.load %arg10[%c0_24, %c0_25] : memref<1x128xf32, #tpu.memory_space<vmem>>, vector<1x128xf32>
    %38 = vector.broadcast %37 : vector<1x128xf32> to vector<8x128xf32>
    %39 = arith.addf %36, %38 : vector<8x128xf32>
    %cst_26 = arith.constant 0.000000e+00 : f32
    %40 = vector.broadcast %cst_26 : f32 to vector<8x128xf32>
    %41 = arith.maximumf %39, %40 : vector<8x128xf32>
    %42 = vector.broadcast %cst_26 : f32 to vector<8x128xf32>
    %43 = arith.subf %39, %42 : vector<8x128xf32>
    %44 = arith.cmpf one, %43, %43 : vector<8x128xf32>
    %45 = vector.broadcast %cst_26 : f32 to vector<8x128xf32>
    %46 = arith.addf %39, %45 : vector<8x128xf32>
    %47 = math.absf %43 : vector<8x128xf32>
    %cst_27 = arith.constant 0.000000e+00 : f32
    %48 = vector.broadcast %cst_27 : f32 to vector<8x128xf32>
    %49 = arith.subf %48, %47 : vector<8x128xf32>
    %50 = math.exp %49 : vector<8x128xf32>
    %51 = math.log1p %50 : vector<8x128xf32>
    %52 = arith.addf %41, %51 : vector<8x128xf32>
    %53 = arith.select %44, %46, %52 : vector<8x128xi1>, vector<8x128xf32>
    %54 = arith.addf %26, %53 : vector<8x128xf32>
    %c0_28 = arith.constant 0 : index
    %c0_29 = arith.constant 0 : index
    %55 = vector.load %arg11[%c0_28, %c0_29] : memref<128x128xf32, #tpu.memory_space<vmem>>, vector<128x128xf32>
    %cst_30 = arith.constant dense<0.000000e+00> : vector<8x128xf32>
    %56 = tpu.matmul %54, %55, %cst_30 {dimension_numbers = #tpu.dot_dimension_numbers<[1], [0], [0], [1], [0, 0, 1, 1], [], []>} : vector<8x128xf32>, vector<128x128xf32>, vector<8x128xf32> -> vector<8x128xf32>
    %57 = arith.addf %54, %56 : vector<8x128xf32>
    %c0_31 = arith.constant 0 : index
    %c0_32 = arith.constant 0 : index
    %58 = vector.load %arg12[%c0_31, %c0_32] : memref<8x128xf32, #tpu.memory_space<vmem>>, vector<8x128xf32>
    tpu.vector_store %arg12[%c0_31, %c0_32], %57 {strides = array<i32>} : memref<8x128xf32, #tpu.memory_space<vmem>>, vector<8x128xf32>,
    return
  }
  func.func @transform_0(%arg0: i32) -> (i32, i32) {
    %c0_i32 = arith.constant 0 : i32
    %c0_i32_0 = arith.constant 0 : i32
    return %arg0, %c0_i32 : i32, i32
  }
  func.func @transform_1(%arg0: i32) -> (i32, i32) {
    %c0_i32 = arith.constant 0 : i32
    %c0_i32_0 = arith.constant 0 : i32
    return %arg0, %c0_i32 : i32, i32
  }
  func.func @transform_2(%arg0: i32) -> (i32, i32) {
    %c0_i32 = arith.constant 0 : i32
    %c0_i32_0 = arith.constant 0 : i32
    %c0_i32_1 = arith.constant 0 : i32
    return %c0_i32, %c0_i32_0 : i32, i32
  }
  func.func @transform_3(%arg0: i32) -> (i32, i32) {
    %c0_i32 = arith.constant 0 : i32
    %c0_i32_0 = arith.constant 0 : i32
    %c0_i32_1 = arith.constant 0 : i32
    return %c0_i32, %c0_i32_0 : i32, i32
  }
  func.func @transform_4(%arg0: i32) -> (i32, i32) {
    %c0_i32 = arith.constant 0 : i32
    %c0_i32_0 = arith.constant 0 : i32
    %c0_i32_1 = arith.constant 0 : i32
    return %c0_i32, %c0_i32_0 : i32, i32
  }
  func.func @transform_5(%arg0: i32) -> (i32, i32) {
    %c0_i32 = arith.constant 0 : i32
    %c0_i32_0 = arith.constant 0 : i32
    %c0_i32_1 = arith.constant 0 : i32
    return %c0_i32, %c0_i32_0 : i32, i32
  }
  func.func @transform_6(%arg0: i32) -> (i32, i32) {
    %c0_i32 = arith.constant 0 : i32
    %c0_i32_0 = arith.constant 0 : i32
    %c0_i32_1 = arith.constant 0 : i32
    return %c0_i32, %c0_i32_0 : i32, i32
  }
  func.func @transform_7(%arg0: i32) -> (i32, i32) {
    %c0_i32 = arith.constant 0 : i32
    %c0_i32_0 = arith.constant 0 : i32
    %c0_i32_1 = arith.constant 0 : i32
    return %c0_i32, %c0_i32_0 : i32, i32
  }
  func.func @transform_8(%arg0: i32) -> (i32, i32) {
    %c0_i32 = arith.constant 0 : i32
    %c0_i32_0 = arith.constant 0 : i32
    %c0_i32_1 = arith.constant 0 : i32
    return %c0_i32, %c0_i32_0 : i32, i32
  }
  func.func @transform_9(%arg0: i32) -> (i32, i32) {
    %c0_i32 = arith.constant 0 : i32
    %c0_i32_0 = arith.constant 0 : i32
    %c0_i32_1 = arith.constant 0 : i32
    return %c0_i32, %c0_i32_0 : i32, i32
  }
  func.func @transform_10(%arg0: i32) -> (i32, i32) {
    %c0_i32 = arith.constant 0 : i32
    %c0_i32_0 = arith.constant 0 : i32
    %c0_i32_1 = arith.constant 0 : i32
    return %c0_i32, %c0_i32_0 : i32, i32
  }
  func.func @transform_11(%arg0: i32) -> (i32, i32) {
    %c0_i32 = arith.constant 0 : i32
    %c0_i32_0 = arith.constant 0 : i32
    return %arg0, %c0_i32 : i32, i32
  }
}

</mosaic_0001>

<llo_original>
// kernel: tpu_custom_call.1
$region0: #{tpu_custom_call.1}
  #allocation0 [shape = 'u32[]', space=smem, size = 0x4, offset = 0x4, fixed_abs, tag = 'smem constant byte address 0x4 - core index']
  #allocation1 [shape = 'u32[144,128]{1,0:T(1,128)}', space=vmem, size = 0x12000, scoped, tag = 'internal scratch']
  %s0 = inlined_call_operand.hbm [shape: f32[16,32], index: 0, kind: input, shape index: {}]
  %s1 = inlined_call_operand.hbm [shape: f32[16,16], index: 1, kind: input, shape index: {}]
  %s2 = inlined_call_operand.hbm [shape: f32[32,64], index: 2, kind: input, shape index: {}]
  %s3 = inlined_call_operand.vmem [shape: f32[1,64], index: 3, kind: input, shape index: {}]
  %s4 = inlined_call_operand.hbm [shape: f32[64,128], index: 4, kind: input, shape index: {}]
  %s5 = inlined_call_operand.vmem [shape: f32[1,128], index: 5, kind: input, shape index: {}]
  %s6 = inlined_call_operand.vmem [shape: f32[16,64], index: 6, kind: input, shape index: {}]
  %s7 = inlined_call_operand.vmem [shape: f32[1,64], index: 7, kind: input, shape index: {}]
  %s8 = inlined_call_operand.hbm [shape: f32[64,128], index: 8, kind: input, shape index: {}]
  %s9 = inlined_call_operand.vmem [shape: f32[1,128], index: 9, kind: input, shape index: {}]
  %s10 = inlined_call_operand.hbm [shape: f32[128,128], index: 10, kind: input, shape index: {}]
  %s11 = inlined_call_operand.hbm [shape: f32[16,128], index: 11, kind: output, shape index: {}]
  %s12 = sld [smem:[#allocation0]]
  $region101: #{tpu_custom_call.1} parent=0
    _
  %s14 = ssub.s32 1, %s12
  %s15 = scalar_select 0, %s14, %s12
  $region1: #{tpu_custom_call.1} parent=0
    #allocation2 [shape = 'u8[8192]{0}', space=vmem, size = 0x2000, scoped, tag = 'input window, operand 0']
    #allocation3 [shape = 's32[2]{0}', space=sflag, size = 0x8, scoped, tag = 'scoped memory for tpu_custom_call.1']
    #allocation4 [shape = 's32[2]{0}', space=sflag, size = 0x8, scoped, tag = 'scoped memory for tpu_custom_call.1']
    #allocation5 [shape = 'u8[8192]{0}', space=vmem, size = 0x2000, scoped, tag = 'input window, operand 1']
    #allocation6 [shape = 's32[2]{0}', space=sflag, size = 0x8, scoped, tag = 'scoped memory for tpu_custom_call.1']
    #allocation7 [shape = 'u8[16384]{0}', space=vmem, size = 0x4000, scoped, tag = 'input window, operand 2, single buffered']
    #allocation8 [shape = 'u8[32768]{0}', space=vmem, size = 0x8000, scoped, tag = 'input window, operand 4, single buffered']
    #allocation9 [shape = 's32[1]{0}', space=sflag, size = 0x4, scoped, tag = 'scoped memory for tpu_custom_call.1']
    #allocation10 [shape = 'u8[32768]{0}', space=vmem, size = 0x8000, scoped, tag = 'input window, operand 8, single buffered']
    #allocation11 [shape = 'u8[65536]{0}', space=vmem, size = 0x10000, scoped, tag = 'input window, operand 10, single buffered']
    #allocation12 [shape = 's32[1]{0}', space=sflag, size = 0x4, scoped, tag = 'scoped memory for tpu_custom_call.1']
    #allocation13 [shape = 'u8[8192]{0}', space=vmem, size = 0x2000, scoped, tag = 'output window, operand 0']
    %16 = vsyncpa [#allocation3], 0
    %s17 = scalar_lea.sflag [#allocation3], 1
    %18 = vsyncpa %s17, 0
    %19 = vsyncpa [#allocation6], 0
    %s20 = scalar_lea.sflag [#allocation6], 1
    %21 = vsyncpa %s20, 0
    %22 = vsyncpa [#allocation9], 0
    %23 = vsyncpa [#allocation12], 0
    %24 = vsyncpa [#allocation4], 0
    %s25 = scalar_lea.sflag [#allocation4], 1
    %26 = vsyncpa %s25, 0
    loop: start=0, step=1, limit=4
    $region2: #{tpu_custom_call.1} parent=1 // loop_pre_header
      _
    $region3: #{tpu_custom_call.1} parent=1 // loop_header
      %s28 = sphi 0, %s32
      %p29 = scmp.ge.s32.totalorder %s28, 4
      %s38 = sphi 0, %s40
      %s41 = sphi 0, %s38
      %s42 = sphi 0, %s41
      %s58 = sphi 0, %s42
      %s64 = sphi 0, %s66
      %s67 = sphi 0, %s64
      %s68 = sphi 0, %s67
      %s84 = sphi 0, %s68
      %s88 = sphi 0, %s88
      %s90 = sphi 0, %s88
      %s91 = sphi 0, %s90
      %s105 = sphi 0, %s91
      %s109 = sphi 0, %s109
      %s111 = sphi 0, %s109
      %s112 = sphi 0, %s111
      %s126 = sphi 0, %s112
      %s130 = sphi 0, %s130
      %s132 = sphi 0, %s130
      %s133 = sphi 0, %s132
      %s147 = sphi 0, %s133
      %s151 = sphi 0, %s151
      %s153 = sphi 0, %s151
      %s154 = sphi 0, %s153
      %s168 = sphi 0, %s154
      %s172 = sphi 0, %s172
      %s174 = sphi 0, %s172
      %s175 = sphi 0, %s174
      %s189 = sphi 0, %s175
      %s193 = sphi 0, %s193
      %s195 = sphi 0, %s193
      %s196 = sphi 0, %s195
      %s210 = sphi 0, %s196
      %s214 = sphi 0, %s214
      %s216 = sphi 0, %s214
      %s217 = sphi 0, %s216
      %s231 = sphi 0, %s217
      %s235 = sphi 0, %s235
      %s237 = sphi 0, %s235
      %s238 = sphi 0, %s237
      %s252 = sphi 0, %s238
      %s256 = sphi 0, %s256
      %s258 = sphi 0, %s256
      %s259 = sphi 0, %s258
      %s273 = sphi 0, %s259
      %s279 = sphi 0, %s281
      %s282 = sphi 0, %s279
      %s283 = sphi 0, %s282
      %s299 = sphi 0, %s283
    $region4: #{tpu_custom_call.1} parent=1 // loop_header_branch
      %31 = sbr.rel (%p29) target = $region8
    $region5: #{tpu_custom_call.1} parent=1 // loop_body
      %s33 = ssub.s32 %s28, 1
      %s34 = ssub.s32 %s28, 2
      %s35 = sadd.s32 %s28, 1
      %s36 = ssub.s32 %s28, %s35
      %p37 = scmp.eq.s32.totalorder %s36, 0
      %s39 = sadd.s32 %s38, 1
      %s40 = scalar_select %p37, %s38, %s39
      %p43 = pneg %p37
      %p44 = scmp.eq.s32.totalorder %s28, 1
      %p45 = por %p43, %p44
      %p46 = scmp.ne.s32.totalorder %s38, %s41
      %p47 = scmp.eq.s32.totalorder %s28, 0
      %p48 = por %p46, %p47
      %p49 = scmp.ne.s32.totalorder %s38, %s41
      %p50 = scmp.eq.s32.totalorder %s33, 1
      %p51 = por %p49, %p50
      %p52 = scmp.ne.s32.totalorder %s41, %s42
      %p53 = scmp.eq.s32.totalorder %s33, 0
      %p54 = por %p52, %p53
      %p55 = scmp.ne.s32.totalorder %s41, %s42
      %p56 = scmp.eq.s32.totalorder %s34, 1
      %p57 = por %p55, %p56
      %p59 = scmp.ne.s32.totalorder %s42, %s58
      %p60 = scmp.eq.s32.totalorder %s34, 0
      %p61 = por %p59, %p60
      %s62 = ssub.s32 %s28, %s35
      %p63 = scmp.eq.s32.totalorder %s62, 0
      %s65 = sadd.s32 %s64, 1
      %s66 = scalar_select %p63, %s64, %s65
      %p69 = pneg %p63
      %p70 = scmp.eq.s32.totalorder %s28, 1
      %p71 = por %p69, %p70
      %p72 = scmp.ne.s32.totalorder %s64, %s67
      %p73 = scmp.eq.s32.totalorder %s28, 0
      %p74 = por %p72, %p73
      %p75 = scmp.ne.s32.totalorder %s64, %s67
      %p76 = scmp.eq.s32.totalorder %s33, 1
      %p77 = por %p75, %p76
      %p78 = scmp.ne.s32.totalorder %s67, %s68
      %p79 = scmp.eq.s32.totalorder %s33, 0
      %p80 = por %p78, %p79
      %p81 = scmp.ne.s32.totalorder %s67, %s68
      %p82 = scmp.eq.s32.totalorder %s34, 1
      %p83 = por %p81, %p82
      %p85 = scmp.ne.s32.totalorder %s68, %s84
      %p86 = scmp.eq.s32.totalorder %s34, 0
      %p87 = por %p85, %p86
      %s89 = sadd.s32 %s88, 1
      %p92 = scmp.eq.s32.totalorder %s28, 1
      %p93 = scmp.ne.s32.totalorder %s88, %s90
      %p94 = scmp.eq.s32.totalorder %s28, 0
      %p95 = por %p93, %p94
      %p96 = scmp.ne.s32.totalorder %s88, %s90
      %p97 = scmp.eq.s32.totalorder %s33, 1
      %p98 = por %p96, %p97
      %p99 = scmp.ne.s32.totalorder %s90, %s91
      %p100 = scmp.eq.s32.totalorder %s33, 0
      %p101 = por %p99, %p100
      %p102 = scmp.ne.s32.totalorder %s90, %s91
      %p103 = scmp.eq.s32.totalorder %s34, 1
      %p104 = por %p102, %p103
      %p106 = scmp.ne.s32.totalorder %s91, %s105
      %p107 = scmp.eq.s32.totalorder %s34, 0
      %p108 = por %p106, %p107
      %s110 = sadd.s32 %s109, 1
      %p113 = scmp.eq.s32.totalorder %s28, 1
      %p114 = scmp.ne.s32.totalorder %s109, %s111
      %p115 = scmp.eq.s32.totalorder %s28, 0
      %p116 = por %p114, %p115
      %p117 = scmp.ne.s32.totalorder %s109, %s111
      %p118 = scmp.eq.s32.totalorder %s33, 1
      %p119 = por %p117, %p118
      %p120 = scmp.ne.s32.totalorder %s111, %s112
      %p121 = scmp.eq.s32.totalorder %s33, 0
      %p122 = por %p120, %p121
      %p123 = scmp.ne.s32.totalorder %s111, %s112
      %p124 = scmp.eq.s32.totalorder %s34, 1
      %p125 = por %p123, %p124
      %p127 = scmp.ne.s32.totalorder %s112, %s126
      %p128 = scmp.eq.s32.totalorder %s34, 0
      %p129 = por %p127, %p128
      %s131 = sadd.s32 %s130, 1
      %p134 = scmp.eq.s32.totalorder %s28, 1
      %p135 = scmp.ne.s32.totalorder %s130, %s132
      %p136 = scmp.eq.s32.totalorder %s28, 0
      %p137 = por %p135, %p136
      %p138 = scmp.ne.s32.totalorder %s130, %s132
      %p139 = scmp.eq.s32.totalorder %s33, 1
      %p140 = por %p138, %p139
      %p141 = scmp.ne.s32.totalorder %s132, %s133
      %p142 = scmp.eq.s32.totalorder %s33, 0
      %p143 = por %p141, %p142
      %p144 = scmp.ne.s32.totalorder %s132, %s133
      %p145 = scmp.eq.s32.totalorder %s34, 1
      %p146 = por %p144, %p145
      %p148 = scmp.ne.s32.totalorder %s133, %s147
      %p149 = scmp.eq.s32.totalorder %s34, 0
      %p150 = por %p148, %p149
      %s152 = sadd.s32 %s151, 1
      %p155 = scmp.eq.s32.totalorder %s28, 1
      %p156 = scmp.ne.s32.totalorder %s151, %s153
      %p157 = scmp.eq.s32.totalorder %s28, 0
      %p158 = por %p156, %p157
      %p159 = scmp.ne.s32.totalorder %s151, %s153
      %p160 = scmp.eq.s32.totalorder %s33, 1
      %p161 = por %p159, %p160
      %p162 = scmp.ne.s32.totalorder %s153, %s154
      %p163 = scmp.eq.s32.totalorder %s33, 0
      %p164 = por %p162, %p163
      %p165 = scmp.ne.s32.totalorder %s153, %s154
      %p166 = scmp.eq.s32.totalorder %s34, 1
      %p167 = por %p165, %p166
      %p169 = scmp.ne.s32.totalorder %s154, %s168
      %p170 = scmp.eq.s32.totalorder %s34, 0
      %p171 = por %p169, %p170
      %s173 = sadd.s32 %s172, 1
      %p176 = scmp.eq.s32.totalorder %s28, 1
      %p177 = scmp.ne.s32.totalorder %s172, %s174
      %p178 = scmp.eq.s32.totalorder %s28, 0
      %p179 = por %p177, %p178
      %p180 = scmp.ne.s32.totalorder %s172, %s174
      %p181 = scmp.eq.s32.totalorder %s33, 1
      %p182 = por %p180, %p181
      %p183 = scmp.ne.s32.totalorder %s174, %s175
      %p184 = scmp.eq.s32.totalorder %s33, 0
      %p185 = por %p183, %p184
      %p186 = scmp.ne.s32.totalorder %s174, %s175
      %p187 = scmp.eq.s32.totalorder %s34, 1
      %p188 = por %p186, %p187
      %p190 = scmp.ne.s32.totalorder %s175, %s189
      %p191 = scmp.eq.s32.totalorder %s34, 0
      %p192 = por %p190, %p191
      %s194 = sadd.s32 %s193, 1
      %p197 = scmp.eq.s32.totalorder %s28, 1
      %p198 = scmp.ne.s32.totalorder %s193, %s195
      %p199 = scmp.eq.s32.totalorder %s28, 0
      %p200 = por %p198, %p199
      %p201 = scmp.ne.s32.totalorder %s193, %s195
      %p202 = scmp.eq.s32.totalorder %s33, 1
      %p203 = por %p201, %p202
      %p204 = scmp.ne.s32.totalorder %s195, %s196
      %p205 = scmp.eq.s32.totalorder %s33, 0
      %p206 = por %p204, %p205
      %p207 = scmp.ne.s32.totalorder %s195, %s196
      %p208 = scmp.eq.s32.totalorder %s34, 1
      %p209 = por %p207, %p208
      %p211 = scmp.ne.s32.totalorder %s196, %s210
      %p212 = scmp.eq.s32.totalorder %s34, 0
      %p213 = por %p211, %p212
      %s215 = sadd.s32 %s214, 1
      %p218 = scmp.eq.s32.totalorder %s28, 1
      %p219 = scmp.ne.s32.totalorder %s214, %s216
      %p220 = scmp.eq.s32.totalorder %s28, 0
      %p221 = por %p219, %p220
      %p222 = scmp.ne.s32.totalorder %s214, %s216
      %p223 = scmp.eq.s32.totalorder %s33, 1
      %p224 = por %p222, %p223
      %p225 = scmp.ne.s32.totalorder %s216, %s217
      %p226 = scmp.eq.s32.totalorder %s33, 0
      %p227 = por %p225, %p226
      %p228 = scmp.ne.s32.totalorder %s216, %s217
      %p229 = scmp.eq.s32.totalorder %s34, 1
      %p230 = por %p228, %p229
      %p232 = scmp.ne.s32.totalorder %s217, %s231
      %p233 = scmp.eq.s32.totalorder %s34, 0
      %p234 = por %p232, %p233
      %s236 = sadd.s32 %s235, 1
      %p239 = scmp.eq.s32.totalorder %s28, 1
      %p240 = scmp.ne.s32.totalorder %s235, %s237
      %p241 = scmp.eq.s32.totalorder %s28, 0
      %p242 = por %p240, %p241
      %p243 = scmp.ne.s32.totalorder %s235, %s237
      %p244 = scmp.eq.s32.totalorder %s33, 1
      %p245 = por %p243, %p244
      %p246 = scmp.ne.s32.totalorder %s237, %s238
      %p247 = scmp.eq.s32.totalorder %s33, 0
      %p248 = por %p246, %p247
      %p249 = scmp.ne.s32.totalorder %s237, %s238
      %p250 = scmp.eq.s32.totalorder %s34, 1
      %p251 = por %p249, %p250
      %p253 = scmp.ne.s32.totalorder %s238, %s252
      %p254 = scmp.eq.s32.totalorder %s34, 0
      %p255 = por %p253, %p254
      %s257 = sadd.s32 %s256, 1
      %p260 = scmp.eq.s32.totalorder %s28, 1
      %p261 = scmp.ne.s32.totalorder %s256, %s258
      %p262 = scmp.eq.s32.totalorder %s28, 0
      %p263 = por %p261, %p262
      %p264 = scmp.ne.s32.totalorder %s256, %s258
      %p265 = scmp.eq.s32.totalorder %s33, 1
      %p266 = por %p264, %p265
      %p267 = scmp.ne.s32.totalorder %s258, %s259
      %p268 = scmp.eq.s32.totalorder %s33, 0
      %p269 = por %p267, %p268
      %p270 = scmp.ne.s32.totalorder %s258, %s259
      %p271 = scmp.eq.s32.totalorder %s34, 1
      %p272 = por %p270, %p271
      %p274 = scmp.ne.s32.totalorder %s259, %s273
      %p275 = scmp.eq.s32.totalorder %s34, 0
      %p276 = por %p274, %p275
      %s277 = ssub.s32 %s28, %s35
      %p278 = scmp.eq.s32.totalorder %s277, 0
      %s280 = sadd.s32 %s279, 1
      %s281 = scalar_select %p278, %s279, %s280
      %p284 = pneg %p278
      %p285 = scmp.eq.s32.totalorder %s28, 1
      %p286 = por %p284, %p285
      %p287 = scmp.ne.s32.totalorder %s279, %s282
      %p288 = scmp.eq.s32.totalorder %s28, 0
      %p289 = por %p287, %p288
      %p290 = scmp.ne.s32.totalorder %s279, %s282
      %p291 = scmp.eq.s32.totalorder %s33, 1
      %p292 = por %p290, %p291
      %p293 = scmp.ne.s32.totalorder %s282, %s283
      %p294 = scmp.eq.s32.totalorder %s33, 0
      %p295 = por %p293, %p294
      %p296 = scmp.ne.s32.totalorder %s282, %s283
      %p297 = scmp.eq.s32.totalorder %s34, 1
      %p298 = por %p296, %p297
      %p300 = scmp.ne.s32.totalorder %s283, %s299
      %p301 = scmp.eq.s32.totalorder %s34, 0
      %p302 = por %p300, %p301
      %p303 = scmp.le.s32.totalorder 1, %s28
      %p304 = scmp.lt.s32.totalorder %s28, 3
      %p305 = pnand %p303, %p304
      %p306 = pneg %p305
      // Predicated region
      $region9: #{tpu_custom_call.1} parent=5 // pred_check
        _
      $region10: #{tpu_custom_call.1} parent=5 // pred_check_branch
        %308 = sbr.rel (%p305) target = $region12
      $region11: #{tpu_custom_call.1} parent=5 // pred_region
        %s309 = ssub.s32 %s28, 1
        // Predicated region
        $region13: #{tpu_custom_call.1} parent=11 // pred_check
          %p310 = pneg %p101
        $region14: #{tpu_custom_call.1} parent=11 // pred_check_branch
          %312 = sbr.rel (%p310) target = $region16
        $region15: #{tpu_custom_call.1} parent=11 // pred_region
          %s314 = ssub.s32 512, 512
          %315 = vsyncadd [#allocation6], %s314
          %s316 = sshll.u32 [#allocation7], 4
          %s317 = int_to_ptr.vmem [resolvable:$true] %s316
          %322 = dma.hbm_to_vmem [thread:$0]  %s2, 512, %s317, [#allocation6], 128, 128, 8
        $region16: #{tpu_custom_call.1} parent=11 // pred_fallthru
          _
        // Predicated region
        $region17: #{tpu_custom_call.1} parent=11 // pred_check
          %p323 = pneg %p122
        $region18: #{tpu_custom_call.1} parent=11 // pred_check_branch
          %325 = sbr.rel (%p323) target = $region20
        $region19: #{tpu_custom_call.1} parent=11 // pred_region
          _
        $region20: #{tpu_custom_call.1} parent=11 // pred_fallthru
          _
        // Predicated region
        $region21: #{tpu_custom_call.1} parent=11 // pred_check
          %p326 = pneg %p143
        $region22: #{tpu_custom_call.1} parent=11 // pred_check_branch
          %328 = sbr.rel (%p326) target = $region24
        $region23: #{tpu_custom_call.1} parent=11 // pred_region
          %s330 = ssub.s32 1024, 1024
          %331 = vsyncadd [#allocation9], %s330
          %s332 = sshll.u32 [#allocation8], 4
          %s333 = int_to_ptr.vmem [resolvable:$true] %s332
          %338 = dma.hbm_to_vmem [thread:$0]  %s4, 1024, %s333, [#allocation9], 128, 128, 8
        $region24: #{tpu_custom_call.1} parent=11 // pred_fallthru
          _
        // Predicated region
        $region25: #{tpu_custom_call.1} parent=11 // pred_check
          %p339 = pneg %p164
        $region26: #{tpu_custom_call.1} parent=11 // pred_check_branch
          %341 = sbr.rel (%p339) target = $region28
        $region27: #{tpu_custom_call.1} parent=11 // pred_region
          _
        $region28: #{tpu_custom_call.1} parent=11 // pred_fallthru
          _
        // Predicated region
        $region29: #{tpu_custom_call.1} parent=11 // pred_check
          %p342 = pneg %p185
        $region30: #{tpu_custom_call.1} parent=11 // pred_check_branch
          %344 = sbr.rel (%p342) target = $region32
        $region31: #{tpu_custom_call.1} parent=11 // pred_region
          _
        $region32: #{tpu_custom_call.1} parent=11 // pred_fallthru
          _
        // Predicated region
        $region33: #{tpu_custom_call.1} parent=11 // pred_check
          %p345 = pneg %p206
        $region34: #{tpu_custom_call.1} parent=11 // pred_check_branch
          %347 = sbr.rel (%p345) target = $region36
        $region35: #{tpu_custom_call.1} parent=11 // pred_region
          _
        $region36: #{tpu_custom_call.1} parent=11 // pred_fallthru
          _
        // Predicated region
        $region37: #{tpu_custom_call.1} parent=11 // pred_check
          %p348 = pneg %p227
        $region38: #{tpu_custom_call.1} parent=11 // pred_check_branch
          %350 = sbr.rel (%p348) target = $region40
        $region39: #{tpu_custom_call.1} parent=11 // pred_region
          %s352 = ssub.s32 1024, 1024
          %353 = vsyncadd [#allocation9], %s352
          %s354 = sshll.u32 [#allocation10], 4
          %s355 = int_to_ptr.vmem [resolvable:$true] %s354
          %360 = dma.hbm_to_vmem [thread:$0]  %s8, 1024, %s355, [#allocation9], 128, 128, 8
        $region40: #{tpu_custom_call.1} parent=11 // pred_fallthru
          _
        // Predicated region
        $region41: #{tpu_custom_call.1} parent=11 // pred_check
          %p361 = pneg %p248
        $region42: #{tpu_custom_call.1} parent=11 // pred_check_branch
          %363 = sbr.rel (%p361) target = $region44
        $region43: #{tpu_custom_call.1} parent=11 // pred_region
          _
        $region44: #{tpu_custom_call.1} parent=11 // pred_fallthru
          _
        // Predicated region
        $region45: #{tpu_custom_call.1} parent=11 // pred_check
          %p364 = pneg %p269
        $region46: #{tpu_custom_call.1} parent=11 // pred_check_branch
          %366 = sbr.rel (%p364) target = $region48
        $region47: #{tpu_custom_call.1} parent=11 // pred_region
          %s368 = ssub.s32 2048, 2048
          %369 = vsyncadd [#allocation12], %s368
          %s370 = sshll.u32 [#allocation11], 4
          %s371 = int_to_ptr.vmem [resolvable:$true] %s370
          %376 = dma.hbm_to_vmem [thread:$0]  %s10, 2048, %s371, [#allocation12], 128, 128, 8
        $region48: #{tpu_custom_call.1} parent=11 // pred_fallthru
          _
      $region12: #{tpu_custom_call.1} parent=5 // pred_fallthru
        _
      %p377 = scmp.lt.s32.totalorder %s28, 2
      // Predicated region
      $region49: #{tpu_custom_call.1} parent=5 // pred_check
        %p378 = pneg %p377
      $region50: #{tpu_custom_call.1} parent=5 // pred_check_branch
        %380 = sbr.rel (%p378) target = $region52
      $region51: #{tpu_custom_call.1} parent=5 // pred_region
        // Predicated region
        $region53: #{tpu_custom_call.1} parent=51 // pred_check
          %p381 = pneg %p48
        $region54: #{tpu_custom_call.1} parent=51 // pred_check_branch
          %383 = sbr.rel (%p381) target = $region56
        $region55: #{tpu_custom_call.1} parent=51 // pred_region
          %s384 = sand.u32 %s38, 1
          %s385 = scalar_lea.sflag [#allocation3], %s384
          %s386 = sand.u32 %s38, 1
          %s387 = smul.addr %s386, 8
          %s388 = scalar_lea.vmem [#allocation2], %s387
          %s390 = ssub.s32 128, 128
          %391 = vsyncadd %s385, %s390
          %s392 = smul.addr %s28, 128
          %s393 = scalar_lea.hbm %s0, %s392
          %s395 = sshll.u32 %s388, 4
          %s396 = int_to_ptr.vmem [resolvable:$true] %s395
          %398 = dma.hbm_to_vmem [thread:$0]  %s393, 128, %s396, %s385
        $region56: #{tpu_custom_call.1} parent=51 // pred_fallthru
          _
        // Predicated region
        $region57: #{tpu_custom_call.1} parent=51 // pred_check
          %p399 = pneg %p74
        $region58: #{tpu_custom_call.1} parent=51 // pred_check_branch
          %401 = sbr.rel (%p399) target = $region60
        $region59: #{tpu_custom_call.1} parent=51 // pred_region
          %s402 = sand.u32 %s28, 1
          %s403 = scalar_lea.sflag [#allocation6], %s402
          %s404 = sand.u32 %s64, 1
          %s405 = smul.addr %s404, 8
          %s406 = scalar_lea.vmem [#allocation5], %s405
          %s408 = ssub.s32 128, 128
          %409 = vsyncadd %s403, %s408
          %s410 = smul.addr %s28, 128
          %s411 = scalar_lea.hbm %s1, %s410
          %s413 = sshll.u32 %s406, 4
          %s414 = int_to_ptr.vmem [resolvable:$true] %s413
          %416 = dma.hbm_to_vmem [thread:$0]  %s411, 128, %s414, %s403
        $region60: #{tpu_custom_call.1} parent=51 // pred_fallthru
          _
      $region52: #{tpu_custom_call.1} parent=5 // pred_fallthru
        _
      %p417 = scmp.le.s32.totalorder 1, %s28
      %p418 = scmp.lt.s32.totalorder %s28, 3
      %p419 = pnand %p417, %p418
      %p420 = pneg %p419
      // Predicated region
      $region61: #{tpu_custom_call.1} parent=5 // pred_check
        _
      $region62: #{tpu_custom_call.1} parent=5 // pred_check_branch
        %422 = sbr.rel (%p419) target = $region64
      $region63: #{tpu_custom_call.1} parent=5 // pred_region
        %s423 = ssub.s32 %s28, 1
        %s424 = sand.u32 %s41, 1
        %s425 = scalar_lea.sflag [#allocation3], %s424
        %s426 = sand.u32 %s41, 1
        %s427 = smul.addr %s426, 8
        %s428 = scalar_lea.vmem [#allocation2], %s427
        // Predicated region
        $region65: #{tpu_custom_call.1} parent=63 // pred_check
          %p429 = pneg %p54
        $region66: #{tpu_custom_call.1} parent=63 // pred_check_branch
          %431 = sbr.rel (%p429) target = $region68
        $region67: #{tpu_custom_call.1} parent=63 // pred_region
          %432 = dma.done %s425, 128
        $region68: #{tpu_custom_call.1} parent=63 // pred_fallthru
          _
        %s433 = sand.u32 %s33, 1
        %s434 = scalar_lea.sflag [#allocation6], %s433
        %s435 = sand.u32 %s67, 1
        %s436 = smul.addr %s435, 8
        %s437 = scalar_lea.vmem [#allocation5], %s436
        // Predicated region
        $region69: #{tpu_custom_call.1} parent=63 // pred_check
          %p438 = pneg %p80
        $region70: #{tpu_custom_call.1} parent=63 // pred_check_branch
          %440 = sbr.rel (%p438) target = $region72
        $region71: #{tpu_custom_call.1} parent=63 // pred_region
          %441 = dma.done %s434, 128
        $region72: #{tpu_custom_call.1} parent=63 // pred_fallthru
          _
        // Predicated region
        $region73: #{tpu_custom_call.1} parent=63 // pred_check
          %p442 = pneg %p101
        $region74: #{tpu_custom_call.1} parent=63 // pred_check_branch
          %444 = sbr.rel (%p442) target = $region76
        $region75: #{tpu_custom_call.1} parent=63 // pred_region
          %445 = dma.done [#allocation6], 512
        $region76: #{tpu_custom_call.1} parent=63 // pred_fallthru
          _
        // Predicated region
        $region77: #{tpu_custom_call.1} parent=63 // pred_check
          %p446 = pneg %p143
        $region78: #{tpu_custom_call.1} parent=63 // pred_check_branch
          %448 = sbr.rel (%p446) target = $region80
        $region79: #{tpu_custom_call.1} parent=63 // pred_region
          %449 = dma.done [#allocation9], 1024
        $region80: #{tpu_custom_call.1} parent=63 // pred_fallthru
          _
        // Predicated region
        $region81: #{tpu_custom_call.1} parent=63 // pred_check
          %p450 = pneg %p227
        $region82: #{tpu_custom_call.1} parent=63 // pred_check_branch
          %452 = sbr.rel (%p450) target = $region84
        $region83: #{tpu_custom_call.1} parent=63 // pred_region
          %453 = dma.done [#allocation9], 1024
        $region84: #{tpu_custom_call.1} parent=63 // pred_fallthru
          _
        // Predicated region
        $region85: #{tpu_custom_call.1} parent=63 // pred_check
          %p454 = pneg %p269
        $region86: #{tpu_custom_call.1} parent=63 // pred_check_branch
          %456 = sbr.rel (%p454) target = $region88
        $region87: #{tpu_custom_call.1} parent=63 // pred_region
          %457 = dma.done [#allocation12], 2048
        $region88: #{tpu_custom_call.1} parent=63 // pred_fallthru
          _
        %s458 = sand.u32 %s41, 1
        %s459 = scalar_lea.sflag [#allocation3], %s458
        %s460 = sand.u32 %s41, 1
        %s461 = smul.addr %s460, 8
        %s462 = scalar_lea.vmem [#allocation2], %s461
        %p463 = pneg %p54
        %p464 = pneg %p51
        %s465 = sand.u32 %s33, 1
        %s466 = scalar_lea.sflag [#allocation6], %s465
        %s467 = sand.u32 %s67, 1
        %s468 = smul.addr %s467, 8
        %s469 = scalar_lea.vmem [#allocation5], %s468
        %p470 = pneg %p80
        %p471 = pneg %p77
        %p472 = pneg %p101
        %p473 = pneg %p98
        %p474 = pneg %p122
        %p475 = pneg %p119
        %p476 = pneg %p143
        %p477 = pneg %p140
        %p478 = pneg %p164
        %p479 = pneg %p161
        %p480 = pneg %p185
        %p481 = pneg %p182
        %p482 = pneg %p206
        %p483 = pneg %p203
        %p484 = pneg %p227
        %p485 = pneg %p224
        %p486 = pneg %p248
        %p487 = pneg %p245
        %p488 = pneg %p269
        %p489 = pneg %p266
        %p490 = pneg %p295
        %p491 = pneg %p292
        %s492 = sand.u32 %s282, 1
        %s493 = scalar_lea.sflag [#allocation4], %s492
        %s494 = sand.u32 %s282, 1
        %s495 = smul.addr %s494, 8
        %s496 = scalar_lea.vmem [#allocation13], %s495
        %v497 = vld [vmem:[%s428] sm:$0xff]
        %v498 = vld [vmem:[#allocation7] sm:$0xff]
        %v499 = vld [vmem:[#allocation7 + $0x8] sm:$0xff]
        %v500 = vld [vmem:[#allocation7 + $0x10] sm:$0xff]
        %v501 = vld [vmem:[#allocation7 + $0x18] sm:$0xff]
        %v502 = vld [vmem:[%s3] sm:$0x1]
        %v504 = vlaneseq
        %v505 = vshrl.u32 %v504, 7
        %v506 = vsub.s32 0, %v505
        %v507 = vrot.slane %v502, %v506
        %vm509 = vcmask 261120
        %v511 = vsel %vm509, %v497, 0
        %513 = vmatprep.subr.mxu0 0.0
        %514 = vmatpush1.msra.mxu0 %v498
        %515 = vmatprep.subr.mxu0 0.0
        %516 = vmatpush1.msra.mxu0 %v499
        %517 = vmatprep.subr.mxu0 0.0
        %518 = vmatpush1.msra.mxu0 %v500
        %519 = vmatprep.subr.mxu0 0.0
        %520 = vmatpush1.msra.mxu0 %v501
        %521 = vmatprep.subr.mxu0 0.0
        %522 = vmatpush1.msra.mxu0 0.0
        %523 = vmatprep.subr.mxu0 0.0
        %524 = vmatpush1.msra.mxu0 0.0
        %525 = vmatprep.subr.mxu0 0.0
        %526 = vmatpush1.msra.mxu0 0.0
        %527 = vmatprep.subr.mxu0 0.0
        %528 = vmatpush1.msra.mxu0 0.0
        %529 = vmatprep.subr.mxu0 0.0
        %530 = vmatpush1.msra.mxu0 0.0
        %531 = vmatprep.subr.mxu0 0.0
        %532 = vmatpush1.msra.mxu0 0.0
        %533 = vmatprep.subr.mxu0 0.0
        %534 = vmatpush1.msra.mxu0 0.0
        %535 = vmatprep.subr.mxu0 0.0
        %536 = vmatpush1.msra.mxu0 0.0
        %537 = vmatprep.subr.mxu0 0.0
        %538 = vmatpush1.msra.mxu0 0.0
        %539 = vmatprep.subr.mxu0 0.0
        %540 = vmatpush1.msra.mxu0 0.0
        %541 = vmatprep.subr.mxu0 0.0
        %542 = vmatpush1.msra.mxu0 0.0
        %543 = vmatprep.subr.mxu0 0.0
        %544 = vmatpush1.msra.mxu0 0.0
        %545 = vmatprep.subr.mxu0 0.0
        %546 = vmatpush1.msra.mxu0 0.0
        %547 = vmatprep.subr.mxu0 0.0
        %548 = vmatpush1.msra.mxu0 0.0
        %549 = vmatprep.subr.mxu0 0.0
        %550 = vmatpush1.msra.mxu0 0.0
        %551 = vmatprep.subr.mxu0 0.0
        %552 = vmatpush1.msra.mxu0 0.0
        %553 = vmatprep.subr.mxu0 0.0
        %554 = vmatpush1.msra.mxu0 0.0
        %555 = vmatprep.subr.mxu0 0.0
        %556 = vmatpush1.msra.mxu0 0.0
        %557 = vmatprep.subr.mxu0 0.0
        %558 = vmatpush1.msra.mxu0 0.0
        %559 = vmatprep.subr.mxu0 0.0
        %560 = vmatpush1.msra.mxu0 0.0
        %561 = vmatprep.subr.mxu0 0.0
        %562 = vmatpush1.msra.mxu0 0.0
        %563 = vmatprep.subr.mxu0 0.0
        %564 = vmatpush1.msra.mxu0 0.0
        %565 = vmatprep.subr.mxu0 0.0
        %566 = vmatpush1.msra.mxu0 0.0
        %567 = vmatprep.subr.mxu0 0.0
        %568 = vmatpush1.msra.mxu0 0.0
        %569 = vmatprep.subr.mxu0 0.0
        %570 = vmatpush1.msra.mxu0 0.0
        %571 = vmatprep.subr.mxu0 0.0
        %572 = vmatpush1.msra.mxu0 0.0
        %573 = vmatprep.subr.mxu0 0.0
        %574 = vmatpush1.msra.mxu0 0.0
        %575 = vmatprep.subr.mxu0 0.0
        %576 = vmatpush1.msra.mxu0 0.0
        %577 = vmatprep.mubr.f32.mxu0 0.0
        %578 = vmatmul.mubr.f32.gmra.mrb[0].mxu0 %v511
        %v579 = vpop.f32.mrb[0].mxu0
        %v580 = vadd.f32 %v507, %v579
        %v581 = vpop.f32.mrb[0].mxu0
        %582 = vdwg.mxu0
        %v583 = vmax.f32 %v580, 0.0
        %v584 = vld [vmem:[#allocation8] sm:$0xff]
        %v585 = vld [vmem:[#allocation8 + $0x8] sm:$0xff]
        %v586 = vld [vmem:[#allocation8 + $0x10] sm:$0xff]
        %v587 = vld [vmem:[#allocation8 + $0x18] sm:$0xff]
        %v588 = vld [vmem:[#allocation8 + $0x20] sm:$0xff]
        %v589 = vld [vmem:[#allocation8 + $0x28] sm:$0xff]
        %v590 = vld [vmem:[#allocation8 + $0x30] sm:$0xff]
        %v591 = vld [vmem:[#allocation8 + $0x38] sm:$0xff]
        %v592 = vld [vmem:[%s5] sm:$0x1]
        %v594 = vlaneseq
        %v595 = vshrl.u32 %v594, 7
        %v596 = vsub.s32 0, %v595
        %v597 = vrot.slane %v592, %v596
        %vm599 = vcmask 523264
        %v601 = vsel %vm599, %v583, 0
        %603 = vmatprep.subr.mxu0 0.0
        %604 = vmatpush1.msra.mxu0 %v584
        %605 = vmatprep.subr.mxu0 0.0
        %606 = vmatpush1.msra.mxu0 %v585
        %607 = vmatprep.subr.mxu0 0.0
        %608 = vmatpush1.msra.mxu0 %v586
        %609 = vmatprep.subr.mxu0 0.0
        %610 = vmatpush1.msra.mxu0 %v587
        %611 = vmatprep.subr.mxu0 0.0
        %612 = vmatpush1.msra.mxu0 %v588
        %613 = vmatprep.subr.mxu0 0.0
        %614 = vmatpush1.msra.mxu0 %v589
        %615 = vmatprep.subr.mxu0 0.0
        %616 = vmatpush1.msra.mxu0 %v590
        %617 = vmatprep.subr.mxu0 0.0
        %618 = vmatpush1.msra.mxu0 %v591
        %619 = vmatprep.subr.mxu0 0.0
        %620 = vmatpush1.msra.mxu0 0.0
        %621 = vmatprep.subr.mxu0 0.0
        %622 = vmatpush1.msra.mxu0 0.0
        %623 = vmatprep.subr.mxu0 0.0
        %624 = vmatpush1.msra.mxu0 0.0
        %625 = vmatprep.subr.mxu0 0.0
        %626 = vmatpush1.msra.mxu0 0.0
        %627 = vmatprep.subr.mxu0 0.0
        %628 = vmatpush1.msra.mxu0 0.0
        %629 = vmatprep.subr.mxu0 0.0
        %630 = vmatpush1.msra.mxu0 0.0
        %631 = vmatprep.subr.mxu0 0.0
        %632 = vmatpush1.msra.mxu0 0.0
        %633 = vmatprep.subr.mxu0 0.0
        %634 = vmatpush1.msra.mxu0 0.0
        %635 = vmatprep.subr.mxu0 0.0
        %636 = vmatpush1.msra.mxu0 0.0
        %637 = vmatprep.subr.mxu0 0.0
        %638 = vmatpush1.msra.mxu0 0.0
        %639 = vmatprep.subr.mxu0 0.0
        %640 = vmatpush1.msra.mxu0 0.0
        %641 = vmatprep.subr.mxu0 0.0
        %642 = vmatpush1.msra.mxu0 0.0
        %643 = vmatprep.subr.mxu0 0.0
        %644 = vmatpush1.msra.mxu0 0.0
        %645 = vmatprep.subr.mxu0 0.0
        %646 = vmatpush1.msra.mxu0 0.0
        %647 = vmatprep.subr.mxu0 0.0
        %648 = vmatpush1.msra.mxu0 0.0
        %649 = vmatprep.subr.mxu0 0.0
        %650 = vmatpush1.msra.mxu0 0.0
        %651 = vmatprep.subr.mxu0 0.0
        %652 = vmatpush1.msra.mxu0 0.0
        %653 = vmatprep.subr.mxu0 0.0
        %654 = vmatpush1.msra.mxu0 0.0
        %655 = vmatprep.subr.mxu0 0.0
        %656 = vmatpush1.msra.mxu0 0.0
        %657 = vmatprep.subr.mxu0 0.0
        %658 = vmatpush1.msra.mxu0 0.0
        %659 = vmatprep.subr.mxu0 0.0
        %660 = vmatpush1.msra.mxu0 0.0
        %661 = vmatprep.subr.mxu0 0.0
        %662 = vmatpush1.msra.mxu0 0.0
        %663 = vmatprep.subr.mxu0 0.0
        %664 = vmatpush1.msra.mxu0 0.0
        %665 = vmatprep.subr.mxu0 0.0
        %666 = vmatpush1.msra.mxu0 0.0
        %667 = vmatprep.mubr.f32.mxu0 0.0
        %668 = vmatmul.mubr.f32.gmra.mrb[0].mxu0 %v601
        %v669 = vpop.f32.mrb[0].mxu0
        %v670 = vadd.f32 %v597, %v669
        %v671 = vpop.f32.mrb[0].mxu0
        %672 = vdwg.mxu0
        %v673 = vmax.f32 %v670, 0.0
        %vm674 = vcmp.ne.f32.partialorder %v670, %v670
        %v675 = vadd.f32 %v670, 0.0
        %v676 = vand.u32 2147483647, %v670
        %v677 = vsub.f32 0.0, %v676
        %v678 = vmul.f32 %v677, 1.442695
        %v679 = vpow.pop %v678
        %v680 = vadd.f32 %v679, 1.0
        %v681 = vlog2.pop %v680
        %v682 = vmul.f32 %v681, 0.6931472
        %v683 = vmul.f32 -0.5, %v679
        %v684 = vadd.f32 %v683, 1.0
        %v685 = vmul.f32 %v684, %v679
        %v686 = vand.u32 2147483647, %v679
        %vm687 = vcmp.lt.f32.partialorder %v686, 0.0004427343
        %v688 = vsel %vm687, %v685, %v682
        %v689 = vadd.f32 %v673, %v688
        %v690 = vsel %vm674, %v675, %v689
        %v691 = vld [vmem:[%s437] sm:$0xff]
        %v692 = vld [vmem:[%s6] sm:$0xff]
        %v693 = vld [vmem:[%s6 + $0x8] sm:$0xff]
        %v694 = vld [vmem:[%s7] sm:$0x1]
        %v696 = vlaneseq
        %v697 = vshrl.u32 %v696, 7
        %v698 = vsub.s32 0, %v697
        %v699 = vrot.slane %v694, %v698
        %vm701 = vcmask 130048
        %v703 = vsel %vm701, %v691, 0
        %705 = vmatprep.subr.mxu0 0.0
        %706 = vmatpush1.msra.mxu0 %v692
        %707 = vmatprep.subr.mxu0 0.0
        %708 = vmatpush1.msra.mxu0 %v693
        %709 = vmatprep.subr.mxu0 0.0
        %710 = vmatpush1.msra.mxu0 0.0
        %711 = vmatprep.subr.mxu0 0.0
        %712 = vmatpush1.msra.mxu0 0.0
        %713 = vmatprep.subr.mxu0 0.0
        %714 = vmatpush1.msra.mxu0 0.0
        %715 = vmatprep.subr.mxu0 0.0
        %716 = vmatpush1.msra.mxu0 0.0
        %717 = vmatprep.subr.mxu0 0.0
        %718 = vmatpush1.msra.mxu0 0.0
        %719 = vmatprep.subr.mxu0 0.0
        %720 = vmatpush1.msra.mxu0 0.0
        %721 = vmatprep.subr.mxu0 0.0
        %722 = vmatpush1.msra.mxu0 0.0
        %723 = vmatprep.subr.mxu0 0.0
        %724 = vmatpush1.msra.mxu0 0.0
        %725 = vmatprep.subr.mxu0 0.0
        %726 = vmatpush1.msra.mxu0 0.0
        %727 = vmatprep.subr.mxu0 0.0
        %728 = vmatpush1.msra.mxu0 0.0
        %729 = vmatprep.subr.mxu0 0.0
        %730 = vmatpush1.msra.mxu0 0.0
        %731 = vmatprep.subr.mxu0 0.0
        %732 = vmatpush1.msra.mxu0 0.0
        %733 = vmatprep.subr.mxu0 0.0
        %734 = vmatpush1.msra.mxu0 0.0
        %735 = vmatprep.subr.mxu0 0.0
        %736 = vmatpush1.msra.mxu0 0.0
        %737 = vmatprep.subr.mxu0 0.0
        %738 = vmatpush1.msra.mxu0 0.0
        %739 = vmatprep.subr.mxu0 0.0
        %740 = vmatpush1.msra.mxu0 0.0
        %741 = vmatprep.subr.mxu0 0.0
        %742 = vmatpush1.msra.mxu0 0.0
        %743 = vmatprep.subr.mxu0 0.0
        %744 = vmatpush1.msra.mxu0 0.0
        %745 = vmatprep.subr.mxu0 0.0
        %746 = vmatpush1.msra.mxu0 0.0
        %747 = vmatprep.subr.mxu0 0.0
        %748 = vmatpush1.msra.mxu0 0.0
        %749 = vmatprep.subr.mxu0 0.0
        %750 = vmatpush1.msra.mxu0 0.0
        %751 = vmatprep.subr.mxu0 0.0
        %752 = vmatpush1.msra.mxu0 0.0
        %753 = vmatprep.subr.mxu0 0.0
        %754 = vmatpush1.msra.mxu0 0.0
        %755 = vmatprep.subr.mxu0 0.0
        %756 = vmatpush1.msra.mxu0 0.0
        %757 = vmatprep.subr.mxu0 0.0
        %758 = vmatpush1.msra.mxu0 0.0
        %759 = vmatprep.subr.mxu0 0.0
        %760 = vmatpush1.msra.mxu0 0.0
        %761 = vmatprep.subr.mxu0 0.0
        %762 = vmatpush1.msra.mxu0 0.0
        %763 = vmatprep.subr.mxu0 0.0
        %764 = vmatpush1.msra.mxu0 0.0
        %765 = vmatprep.subr.mxu0 0.0
        %766 = vmatpush1.msra.mxu0 0.0
        %767 = vmatprep.subr.mxu0 0.0
        %768 = vmatpush1.msra.mxu0 0.0
        %769 = vmatprep.mubr.f32.mxu0 0.0
        %770 = vmatmul.mubr.f32.gmra.mrb[0].mxu0 %v703
        %v771 = vpop.f32.mrb[0].mxu0
        %v772 = vadd.f32 %v699, %v771
        %v773 = vpop.f32.mrb[0].mxu0
        %774 = vdwg.mxu0
        %v775 = vmax.f32 %v772, 0.0
        %v776 = vld [vmem:[#allocation10] sm:$0xff]
        %v777 = vld [vmem:[#allocation10 + $0x8] sm:$0xff]
        %v778 = vld [vmem:[#allocation10 + $0x10] sm:$0xff]
        %v779 = vld [vmem:[#allocation10 + $0x18] sm:$0xff]
        %v780 = vld [vmem:[#allocation10 + $0x20] sm:$0xff]
        %v781 = vld [vmem:[#allocation10 + $0x28] sm:$0xff]
        %v782 = vld [vmem:[#allocation10 + $0x30] sm:$0xff]
        %v783 = vld [vmem:[#allocation10 + $0x38] sm:$0xff]
        %v784 = vld [vmem:[%s9] sm:$0x1]
        %v786 = vlaneseq
        %v787 = vshrl.u32 %v786, 7
        %v788 = vsub.s32 0, %v787
        %v789 = vrot.slane %v784, %v788
        %v792 = vsel %vm599, %v775, 0
        %794 = vmatprep.subr.mxu0 0.0
        %795 = vmatpush1.msra.mxu0 %v776
        %796 = vmatprep.subr.mxu0 0.0
        %797 = vmatpush1.msra.mxu0 %v777
        %798 = vmatprep.subr.mxu0 0.0
        %799 = vmatpush1.msra.mxu0 %v778
        %800 = vmatprep.subr.mxu0 0.0
        %801 = vmatpush1.msra.mxu0 %v779
        %802 = vmatprep.subr.mxu0 0.0
        %803 = vmatpush1.msra.mxu0 %v780
        %804 = vmatprep.subr.mxu0 0.0
        %805 = vmatpush1.msra.mxu0 %v781
        %806 = vmatprep.subr.mxu0 0.0
        %807 = vmatpush1.msra.mxu0 %v782
        %808 = vmatprep.subr.mxu0 0.0
        %809 = vmatpush1.msra.mxu0 %v783
        %810 = vmatprep.subr.mxu0 0.0
        %811 = vmatpush1.msra.mxu0 0.0
        %812 = vmatprep.subr.mxu0 0.0
        %813 = vmatpush1.msra.mxu0 0.0
        %814 = vmatprep.subr.mxu0 0.0
        %815 = vmatpush1.msra.mxu0 0.0
        %816 = vmatprep.subr.mxu0 0.0
        %817 = vmatpush1.msra.mxu0 0.0
        %818 = vmatprep.subr.mxu0 0.0
        %819 = vmatpush1.msra.mxu0 0.0
        %820 = vmatprep.subr.mxu0 0.0
        %821 = vmatpush1.msra.mxu0 0.0
        %822 = vmatprep.subr.mxu0 0.0
        %823 = vmatpush1.msra.mxu0 0.0
        %824 = vmatprep.subr.mxu0 0.0
        %825 = vmatpush1.msra.mxu0 0.0
        %826 = vmatprep.subr.mxu0 0.0
        %827 = vmatpush1.msra.mxu0 0.0
        %828 = vmatprep.subr.mxu0 0.0
        %829 = vmatpush1.msra.mxu0 0.0
        %830 = vmatprep.subr.mxu0 0.0
        %831 = vmatpush1.msra.mxu0 0.0
        %832 = vmatprep.subr.mxu0 0.0
        %833 = vmatpush1.msra.mxu0 0.0
        %834 = vmatprep.subr.mxu0 0.0
        %835 = vmatpush1.msra.mxu0 0.0
        %836 = vmatprep.subr.mxu0 0.0
        %837 = vmatpush1.msra.mxu0 0.0
        %838 = vmatprep.subr.mxu0 0.0
        %839 = vmatpush1.msra.mxu0 0.0
        %840 = vmatprep.subr.mxu0 0.0
        %841 = vmatpush1.msra.mxu0 0.0
        %842 = vmatprep.subr.mxu0 0.0
        %843 = vmatpush1.msra.mxu0 0.0
        %844 = vmatprep.subr.mxu0 0.0
        %845 = vmatpush1.msra.mxu0 0.0
        %846 = vmatprep.subr.mxu0 0.0
        %847 = vmatpush1.msra.mxu0 0.0
        %848 = vmatprep.subr.mxu0 0.0
        %849 = vmatpush1.msra.mxu0 0.0
        %850 = vmatprep.subr.mxu0 0.0
        %851 = vmatpush1.msra.mxu0 0.0
        %852 = vmatprep.subr.mxu0 0.0
        %853 = vmatpush1.msra.mxu0 0.0
        %854 = vmatprep.subr.mxu0 0.0
        %855 = vmatpush1.msra.mxu0 0.0
        %856 = vmatprep.subr.mxu0 0.0
        %857 = vmatpush1.msra.mxu0 0.0
        %858 = vmatprep.mubr.f32.mxu0 0.0
        %859 = vmatmul.mubr.f32.gmra.mrb[0].mxu0 %v792
        %v860 = vpop.f32.mrb[0].mxu0
        %v861 = vadd.f32 %v789, %v860
        %v862 = vpop.f32.mrb[0].mxu0
        %863 = vdwg.mxu0
        %v864 = vmax.f32 %v861, 0.0
        %vm865 = vcmp.ne.f32.partialorder %v861, %v861
        %v866 = vadd.f32 %v861, 0.0
        %v867 = vand.u32 2147483647, %v861
        %v868 = vsub.f32 0.0, %v867
        %v869 = vmul.f32 %v868, 1.442695
        %v870 = vpow.pop %v869
        %v871 = vadd.f32 %v870, 1.0
        %v872 = vlog2.pop %v871
        %v873 = vmul.f32 %v872, 0.6931472
        %v874 = vmul.f32 -0.5, %v870
        %v875 = vadd.f32 %v874, 1.0
        %v876 = vmul.f32 %v875, %v870
        %v877 = vand.u32 2147483647, %v870
        %vm878 = vcmp.lt.f32.partialorder %v877, 0.0004427343
        %v879 = vsel %vm878, %v876, %v873
        %v880 = vadd.f32 %v864, %v879
        %v881 = vsel %vm865, %v866, %v880
        %v882 = vadd.f32 %v690, %v881
        %v883 = vld [vmem:[#allocation11] sm:$0xff]
        %v884 = vld [vmem:[#allocation11 + $0x8] sm:$0xff]
        %v885 = vld [vmem:[#allocation11 + $0x10] sm:$0xff]
        %v886 = vld [vmem:[#allocation11 + $0x18] sm:$0xff]
        %v887 = vld [vmem:[#allocation11 + $0x20] sm:$0xff]
        %v888 = vld [vmem:[#allocation11 + $0x28] sm:$0xff]
        %v889 = vld [vmem:[#allocation11 + $0x30] sm:$0xff]
        %v890 = vld [vmem:[#allocation11 + $0x38] sm:$0xff]
        %v891 = vld [vmem:[#allocation11 + $0x40] sm:$0xff]
        %v892 = vld [vmem:[#allocation11 + $0x48] sm:$0xff]
        %v893 = vld [vmem:[#allocation11 + $0x50] sm:$0xff]
        %v894 = vld [vmem:[#allocation11 + $0x58] sm:$0xff]
        %v895 = vld [vmem:[#allocation11 + $0x60] sm:$0xff]
        %v896 = vld [vmem:[#allocation11 + $0x68] sm:$0xff]
        %v897 = vld [vmem:[#allocation11 + $0x70] sm:$0xff]
        %v898 = vld [vmem:[#allocation11 + $0x78] sm:$0xff]
        %899 = vmatprep.subr.mxu0 0.0
        %900 = vmatpush1.msra.mxu0 %v883
        %901 = vmatprep.subr.mxu0 0.0
        %902 = vmatpush1.msra.mxu0 %v884
        %903 = vmatprep.subr.mxu0 0.0
        %904 = vmatpush1.msra.mxu0 %v885
        %905 = vmatprep.subr.mxu0 0.0
        %906 = vmatpush1.msra.mxu0 %v886
        %907 = vmatprep.subr.mxu0 0.0
        %908 = vmatpush1.msra.mxu0 %v887
        %909 = vmatprep.subr.mxu0 0.0
        %910 = vmatpush1.msra.mxu0 %v888
        %911 = vmatprep.subr.mxu0 0.0
        %912 = vmatpush1.msra.mxu0 %v889
        %913 = vmatprep.subr.mxu0 0.0
        %914 = vmatpush1.msra.mxu0 %v890
        %915 = vmatprep.subr.mxu0 0.0
        %916 = vmatpush1.msra.mxu0 %v891
        %917 = vmatprep.subr.mxu0 0.0
        %918 = vmatpush1.msra.mxu0 %v892
        %919 = vmatprep.subr.mxu0 0.0
        %920 = vmatpush1.msra.mxu0 %v893
        %921 = vmatprep.subr.mxu0 0.0
        %922 = vmatpush1.msra.mxu0 %v894
        %923 = vmatprep.subr.mxu0 0.0
        %924 = vmatpush1.msra.mxu0 %v895
        %925 = vmatprep.subr.mxu0 0.0
        %926 = vmatpush1.msra.mxu0 %v896
        %927 = vmatprep.subr.mxu0 0.0
        %928 = vmatpush1.msra.mxu0 %v897
        %929 = vmatprep.subr.mxu0 0.0
        %930 = vmatpush1.msra.mxu0 %v898
        %931 = vmatprep.subr.mxu0 0.0
        %932 = vmatpush1.msra.mxu0 0.0
        %933 = vmatprep.subr.mxu0 0.0
        %934 = vmatpush1.msra.mxu0 0.0
        %935 = vmatprep.subr.mxu0 0.0
        %936 = vmatpush1.msra.mxu0 0.0
        %937 = vmatprep.subr.mxu0 0.0
        %938 = vmatpush1.msra.mxu0 0.0
        %939 = vmatprep.subr.mxu0 0.0
        %940 = vmatpush1.msra.mxu0 0.0
        %941 = vmatprep.subr.mxu0 0.0
        %942 = vmatpush1.msra.mxu0 0.0
        %943 = vmatprep.subr.mxu0 0.0
        %944 = vmatpush1.msra.mxu0 0.0
        %945 = vmatprep.subr.mxu0 0.0
        %946 = vmatpush1.msra.mxu0 0.0
        %947 = vmatprep.subr.mxu0 0.0
        %948 = vmatpush1.msra.mxu0 0.0
        %949 = vmatprep.subr.mxu0 0.0
        %950 = vmatpush1.msra.mxu0 0.0
        %951 = vmatprep.subr.mxu0 0.0
        %952 = vmatpush1.msra.mxu0 0.0
        %953 = vmatprep.subr.mxu0 0.0
        %954 = vmatpush1.msra.mxu0 0.0
        %955 = vmatprep.subr.mxu0 0.0
        %956 = vmatpush1.msra.mxu0 0.0
        %957 = vmatprep.subr.mxu0 0.0
        %958 = vmatpush1.msra.mxu0 0.0
        %959 = vmatprep.subr.mxu0 0.0
        %960 = vmatpush1.msra.mxu0 0.0
        %961 = vmatprep.subr.mxu0 0.0
        %962 = vmatpush1.msra.mxu0 0.0
        %963 = vmatprep.mubr.f32.mxu0 0.0
        %964 = vmatmul.mubr.f32.gmra.mrb[0].mxu0 %v882
        %v965 = vpop.f32.mrb[0].mxu0
        %v966 = vadd.f32 0.0, %v965
        %v967 = vpop.f32.mrb[0].mxu0
        %968 = vdwg.mxu0
        %v969 = vadd.f32 %v882, %v966
        %970 = vst [vmem:[%s496] sm:$0xff] %v969
        %s971 = sand.u32 %s282, 1
        %s972 = scalar_lea.sflag [#allocation4], %s971
        %s973 = sand.u32 %s282, 1
        %s974 = smul.addr %s973, 8
        %s975 = scalar_lea.vmem [#allocation13], %s974
        // Predicated region
        $region89: #{tpu_custom_call.1} parent=63 // pred_check
          %p976 = pneg %p292
        $region90: #{tpu_custom_call.1} parent=63 // pred_check_branch
          %978 = sbr.rel (%p976) target = $region92
        $region91: #{tpu_custom_call.1} parent=63 // pred_region
          %s980 = ssub.s32 128, 128
          %981 = vsyncadd %s972, %s980
          %s982 = smul.addr %s33, 128
          %s983 = scalar_lea.hbm %s11, %s982
          %s985 = sshll.u32 %s975, 4
          %s986 = int_to_ptr.vmem [resolvable:$true] %s985
          %988 = dma.vmem_to_hbm [thread:$0]  %s986, 128, %s983, %s972
        $region92: #{tpu_custom_call.1} parent=63 // pred_fallthru
          _
      $region64: #{tpu_custom_call.1} parent=5 // pred_fallthru
        _
      %p989 = scmp.le.s32.totalorder 2, %s28
      // Predicated region
      $region93: #{tpu_custom_call.1} parent=5 // pred_check
        %p990 = pneg %p989
      $region94: #{tpu_custom_call.1} parent=5 // pred_check_branch
        %992 = sbr.rel (%p990) target = $region96
      $region95: #{tpu_custom_call.1} parent=5 // pred_region
        %s993 = ssub.s32 %s28, 2
        // Predicated region
        $region97: #{tpu_custom_call.1} parent=95 // pred_check
          %p994 = pneg %p298
        $region98: #{tpu_custom_call.1} parent=95 // pred_check_branch
          %996 = sbr.rel (%p994) target = $region100
        $region99: #{tpu_custom_call.1} parent=95 // pred_region
          %s997 = sand.u32 %s283, 1
          %s998 = scalar_lea.sflag [#allocation4], %s997
          %s999 = sand.u32 %s283, 1
          %s1000 = smul.addr %s999, 8
          %s1001 = scalar_lea.vmem [#allocation13], %s1000
          %1002 = dma.done %s998, 128
        $region100: #{tpu_custom_call.1} parent=95 // pred_fallthru
          _
      $region96: #{tpu_custom_call.1} parent=5 // pred_fallthru
        _
    $region6: #{tpu_custom_call.1} parent=1 // loop_footer
      %s32 = sadd.s32 1, %s28
    $region7: #{tpu_custom_call.1} parent=1 // loop_footer_branch
      %27 = sbr.rel target = $region3
    $region8: #{tpu_custom_call.1} parent=1 // loop_exit
      _
    %1003 = vsyncpa [#allocation3], 1
    %s1004 = scalar_lea.sflag [#allocation3], 1
    %1005 = vsyncpa %s1004, 1
    %1006 = vsyncpa [#allocation6], 1
    %s1007 = scalar_lea.sflag [#allocation6], 1
    %1008 = vsyncpa %s1007, 1
    %1009 = vsyncpa [#allocation9], 1
    %1010 = vsyncpa [#allocation12], 1
    %1011 = vsyncpa [#allocation4], 1
    %s1012 = scalar_lea.sflag [#allocation4], 1
    %1013 = vsyncpa %s1012, 1

</llo_original>
